<compile_context>
chip_gen: v7x
topology: tpu7x:2x2x1
jax: 0.10.0
libtpu: 0.0.40
codegen_flags: <defaults>
</compile_context>

<pallas_src>
import jax
import jax.numpy as jnp
from jax import lax
from jax.experimental import pallas as pl
from jax.experimental.pallas import tpu as pltpu

IN_DIM = 2
HID = 64
METRIC = 2 * HID      # 128
NUM_CLASSES = 8

# Row layout of the packed constant "misc" buffer (MISC_ROWS, 128):
#   rows 0-1 : w0 (2, 64)            cols 0:64
#   row  2-5 : b0, b1, b2, b3        cols 0:64
#   row  6   : b4                    cols 0:128
#   row  7   : w5 as a row           cols 0:128
#   row  8   : b5                    col 0
#   rows 9-16: embedding table (8,64) cols 0:64
MISC_ROWS = 24
ROW_W0 = 0
ROW_B0 = 2
ROW_B4 = 6
ROW_W5 = 7
ROW_B5 = 8
ROW_EMB = 9


def _lrelu(v):
    # slope 0.1 < 1  =>  leaky_relu(v) == max(v, 0.1*v)
    return jnp.maximum(v, 0.1 * v)


def _round_up(n, m):
    return ((n + m - 1) // m) * m


def make_discriminator_kernel(mxu_dtype=jnp.float32):
    """Build the kernel body. mxu_dtype narrows only the MXU matmul operands."""

    def discriminator_kernel(
        x_ref, label_ref, w123_ref, w4_ref, misc_ref,
        ms_norm_ref, out1_ref, out2_ref,
    ):
        bm = x_ref.shape[0]

        def mxu_dot(a, w):
            return jnp.dot(a.astype(mxu_dtype), w.astype(mxu_dtype),
                           preferred_element_type=jnp.float32)

        x = x_ref[...].astype(jnp.float32)

        # Unpack the constant slab (static slices of a VMEM ref are cheap).
        w0r0 = misc_ref[ROW_W0 + 0:ROW_W0 + 1, 0:HID]
        w0r1 = misc_ref[ROW_W0 + 1:ROW_W0 + 2, 0:HID]
        b0 = misc_ref[ROW_B0 + 0:ROW_B0 + 1, 0:HID]
        b1 = misc_ref[ROW_B0 + 1:ROW_B0 + 2, 0:HID]
        b2 = misc_ref[ROW_B0 + 2:ROW_B0 + 3, 0:HID]
        b3 = misc_ref[ROW_B0 + 3:ROW_B0 + 4, 0:HID]
        b4 = misc_ref[ROW_B4:ROW_B4 + 1, :]
        w5row = misc_ref[ROW_W5:ROW_W5 + 1, :]
        b5 = misc_ref[ROW_B5:ROW_B5 + 1, 0:1]

        # --- Layer 0 (K=2): pure VPU broadcast-multiplies, no MXU pass. ---
        h = _lrelu(x[:, 0:1] * w0r0 + x[:, 1:2] * w0r1 + b0)

        # --- Layers 1-3: 64x64 matmuls on the MXU (stacked weight buffer). ---
        h = _lrelu(mxu_dot(h, w123_ref[0:HID, :]) + b1)
        h = _lrelu(mxu_dot(h, w123_ref[HID:2 * HID, :]) + b2)
        h = _lrelu(mxu_dot(h, w123_ref[2 * HID:3 * HID, :]) + b3)

        # --- Contrastive head: 64 -> 128 on the MXU. ---
        metric_space = mxu_dot(h, w4_ref[...]) + b4

        # out1: N=1 head as a VPU multiply + lane reduction (w5 pre-reshaped to
        # a lane-dense (1, 128) row). Written as its own narrow (bm, 1) output.
        out1_ref[...] = (jnp.sum(metric_space * w5row, axis=1, keepdims=True)
                         + b5)

        # F.normalize(metric_space, dim=1) = ms * rsqrt(max(||ms||^2, 1e-24)).
        sumsq = jnp.sum(metric_space * metric_space, axis=1, keepdims=True)
        inv_norm = lax.rsqrt(jnp.maximum(sumsq, 1e-24))
        ms_norm_ref[...] = metric_space * inv_norm

        # --- Conditional projection: embedding lookup as a 3-level binary
        #     select tree over the label bits (num_classes = 8). Label
        #     broadcast hoisted once; 3 compares + 7 selects, all VPU.
        lblb = jnp.broadcast_to(label_ref[...], (bm, HID))      # (bm, 64) int32
        m0 = (lblb & 1) != 0
        m1 = (lblb & 2) != 0
        m2 = (lblb & 4) != 0

        def emb_row(c):
            return misc_ref[ROW_EMB + c:ROW_EMB + c + 1, 0:HID]  # (1, 64)

        e01 = jnp.where(m0, emb_row(1), emb_row(0))
        e23 = jnp.where(m0, emb_row(3), emb_row(2))
        e45 = jnp.where(m0, emb_row(5), emb_row(4))
        e67 = jnp.where(m0, emb_row(7), emb_row(6))
        e0123 = jnp.where(m1, e23, e01)
        e4567 = jnp.where(m1, e67, e45)
        h_label = jnp.where(m2, e4567, e0123)

        out2_ref[...] = jnp.sum(h * h_label, axis=1, keepdims=True)

    return discriminator_kernel


def discriminator_forward(x, label, params, *, mxu_dtype=jnp.float32,
                          block_batch=1024):
    """Run the fused Discriminator forward. Returns (normalized_metric, out2, out1+out2)."""
    B = x.shape[0]
    (w0, b0, w1, b1, w2, b2, w3, b3, w4, b4, w5, b5, emb) = params

    # --- Batch tiling ------------------------------------------------------
    # Large tiles (default 1024 rows) amortize the ~0.35 us per-grid-step
    # overhead; at B > block_batch the grid automatically has >= 2 steps so the
    # "parallel" axis shards across v7x's two TensorCores. Per-tile VMEM
    # footprint (~1 MB at bm=1024) is tiny even for v7x's 64 MiB VMEM.
    block_batch = max(8, _round_up(block_batch, 8))
    if _round_up(B, 8) <= block_batch:
        bm = _round_up(B, 8)          # single tile covers the whole batch
    else:
        bm = block_batch
    Bp = _round_up(B, bm)
    nb = Bp // bm

    if Bp != B:
        x = jnp.pad(x, ((0, Bp - B), (0, 0)))
        label = jnp.pad(label, ((0, Bp - B),))
    label2d = label.astype(jnp.int32).reshape(Bp, 1)

    # --- Pack the constant operands into 3 streams -------------------------
    w123 = jnp.concatenate([w1, w2, w3], axis=0)            # (192, 64)

    misc = jnp.zeros((MISC_ROWS, METRIC), jnp.float32)
    misc = misc.at[ROW_W0:ROW_W0 + IN_DIM, 0:HID].set(w0)
    misc = misc.at[ROW_B0 + 0, 0:HID].set(b0[0])
    misc = misc.at[ROW_B0 + 1, 0:HID].set(b1[0])
    misc = misc.at[ROW_B0 + 2, 0:HID].set(b2[0])
    misc = misc.at[ROW_B0 + 3, 0:HID].set(b3[0])
    misc = misc.at[ROW_B4, 0:METRIC].set(b4[0])
    misc = misc.at[ROW_W5, 0:METRIC].set(w5.reshape(METRIC))
    misc = misc.at[ROW_B5, 0].set(b5[0, 0])
    misc = misc.at[ROW_EMB:ROW_EMB + NUM_CLASSES, 0:HID].set(emb)

    in_specs = [
        pl.BlockSpec((bm, IN_DIM), lambda i: (i, 0)),          # x
        pl.BlockSpec((bm, 1), lambda i: (i, 0)),               # label
        pl.BlockSpec((3 * HID, HID), lambda i: (0, 0)),        # w1|w2|w3 stack
        pl.BlockSpec((HID, METRIC), lambda i: (0, 0)),         # w4
        pl.BlockSpec((MISC_ROWS, METRIC), lambda i: (0, 0)),   # packed constants
    ]
    out_specs = (
        pl.BlockSpec((bm, METRIC), lambda i: (i, 0)),          # normalized metric
        pl.BlockSpec((bm, 1), lambda i: (i, 0)),               # out1
        pl.BlockSpec((bm, 1), lambda i: (i, 0)),               # out2
    )

    ms_norm, out1, out2 = pl.pallas_call(
        make_discriminator_kernel(mxu_dtype),
        out_shape=(
            jax.ShapeDtypeStruct((Bp, METRIC), jnp.float32),
            jax.ShapeDtypeStruct((Bp, 1), jnp.float32),
            jax.ShapeDtypeStruct((Bp, 1), jnp.float32),
        ),
        grid_spec=pltpu.PrefetchScalarGridSpec(
            num_scalar_prefetch=0,
            grid=(nb,),
            in_specs=in_specs,
            out_specs=out_specs,
        ),
        compiler_params=pltpu.CompilerParams(
            dimension_semantics=("parallel",)),
    )(x, label2d, w123, w4, misc)

    ms_norm = ms_norm[:B]
    o1 = out1[:B, 0]
    o2 = out2[:B, 0]
    # out1 + out2 done outside the kernel (XLA fuses it into the slices).
    return ms_norm, o2, o1 + o2


def init_params(key):
    """Deterministic synthetic parameters (shapes follow the module __init__)."""
    dims_in = [IN_DIM, HID, HID, HID, HID, METRIC]
    dims_out = [HID, HID, HID, HID, METRIC, 1]
    params = []
    keys = jax.random.split(key, len(dims_in) + 1)
    for i, (din, dout) in enumerate(zip(dims_in, dims_out)):
        kw, kb = jax.random.split(keys[i])
        w = jax.random.normal(kw, (din, dout), jnp.float32) * (1.0 / jnp.sqrt(din))
        b = jax.random.normal(kb, (1, dout), jnp.float32) * 0.01
        params += [w, b]
    emb = jax.random.normal(keys[-1], (NUM_CLASSES, HID), jnp.float32) * 0.1
    params.append(emb)
    return params


def reference_forward(x, label, params):
    (w0, b0, w1, b1, w2, b2, w3, b3, w4, b4, w5, b5, emb) = params
    h = x
    for w, b in ((w0, b0), (w1, b1), (w2, b2), (w3, b3)):
        h = _lrelu(h @ w + b)
    ms = h @ w4 + b4
    out1 = (ms @ w5 + b5)[:, 0]
    h_label = emb[label]
    out2 = jnp.sum(h * h_label, axis=1)
    norm = jnp.sqrt(jnp.sum(ms * ms, axis=1, keepdims=True))
    ms_n = ms / jnp.maximum(norm, 1e-12)
    return ms_n, out2, out1 + out2


if __name__ == "__main__":
    key = jax.random.PRNGKey(0)
    kx, kl, kp = jax.random.split(key, 3)

    B = 8
    x = jax.random.normal(kx, (B, IN_DIM), jnp.float32)
    label = jax.random.randint(kl, (B,), 0, NUM_CLASSES, jnp.int32)
    params = init_params(kp)

    ms_norm, out2, out_sum = jax.block_until_ready(
        discriminator_forward(x, label, params)
    )

    # Sanity-check against a plain-JAX reference.
    r_ms, r_out2, r_sum = reference_forward(x, label, params)
    assert jnp.allclose(ms_norm, r_ms, atol=1e-4, rtol=1e-4), "metric_space mismatch"
    assert jnp.allclose(out2, r_out2, atol=1e-4, rtol=1e-4), "out2 mismatch"
    assert jnp.allclose(out_sum, r_sum, atol=1e-4, rtol=1e-4), "out1+out2 mismatch"

    print("KERNEL_OK")
</pallas_src>

<mosaic_0001>
module attributes {stable_mosaic.version = 11 : i64} {
  func.func @discriminator_kernel(%arg0: i32, %arg1: memref<8x2xf32, #tpu.memory_space<vmem>>, %arg2: memref<8x1xi32, #tpu.memory_space<vmem>>, %arg3: memref<192x64xf32, #tpu.memory_space<vmem>>, %arg4: memref<64x128xf32, #tpu.memory_space<vmem>>, %arg5: memref<24x128xf32, #tpu.memory_space<vmem>>, %arg6: memref<8x128xf32, #tpu.memory_space<vmem>>, %arg7: memref<8x1xf32, #tpu.memory_space<vmem>>, %arg8: memref<8x1xf32, #tpu.memory_space<vmem>>) attributes {dimension_semantics = [#tpu.dimension_semantics<parallel>], iteration_bounds = array<i64: 1>, scalar_prefetch = 0 : i64, scratch_operands = 0 : i64, tpu.core_type = #tpu.core_type<tc>, window_params = [{transform_indices = @transform_0, window_bounds = array<i64: 8, 2>}, {transform_indices = @transform_1, window_bounds = array<i64: 8, 1>}, {pipeline_mode = #tpu.pipeline_mode<synchronous>, transform_indices = @transform_2, window_bounds = array<i64: 192, 64>}, {pipeline_mode = #tpu.pipeline_mode<synchronous>, transform_indices = @transform_3, window_bounds = array<i64: 64, 128>}, {pipeline_mode = #tpu.pipeline_mode<synchronous>, transform_indices = @transform_4, window_bounds = array<i64: 24, 128>}, {transform_indices = @transform_5, window_bounds = array<i64: 8, 128>}, {transform_indices = @transform_6, window_bounds = array<i64: 8, 1>}, {transform_indices = @transform_7, window_bounds = array<i64: 8, 1>}]} {
    %c0 = arith.constant 0 : index
    %c0_0 = arith.constant 0 : index
    %0 = vector.load %arg1[%c0, %c0_0] : memref<8x2xf32, #tpu.memory_space<vmem>>, vector<8x2xf32>
    %c0_1 = arith.constant 0 : index
    %c0_2 = arith.constant 0 : index
    %1 = vector.load %arg5[%c0_1, %c0_2] : memref<24x128xf32, #tpu.memory_space<vmem>>, vector<1x64xf32>
    %c1 = arith.constant 1 : index
    %c0_3 = arith.constant 0 : index
    %2 = vector.load %arg5[%c1, %c0_3] : memref<24x128xf32, #tpu.memory_space<vmem>>, vector<1x64xf32>
    %c2 = arith.constant 2 : index
    %c0_4 = arith.constant 0 : index
    %3 = vector.load %arg5[%c2, %c0_4] : memref<24x128xf32, #tpu.memory_space<vmem>>, vector<1x64xf32>
    %c3 = arith.constant 3 : index
    %c0_5 = arith.constant 0 : index
    %4 = vector.load %arg5[%c3, %c0_5] : memref<24x128xf32, #tpu.memory_space<vmem>>, vector<1x64xf32>
    %c4 = arith.constant 4 : index
    %c0_6 = arith.constant 0 : index
    %5 = vector.load %arg5[%c4, %c0_6] : memref<24x128xf32, #tpu.memory_space<vmem>>, vector<1x64xf32>
    %c5 = arith.constant 5 : index
    %c0_7 = arith.constant 0 : index
    %6 = vector.load %arg5[%c5, %c0_7] : memref<24x128xf32, #tpu.memory_space<vmem>>, vector<1x64xf32>
    %c6 = arith.constant 6 : index
    %c0_8 = arith.constant 0 : index
    %7 = vector.load %arg5[%c6, %c0_8] : memref<24x128xf32, #tpu.memory_space<vmem>>, vector<1x128xf32>
    %c7 = arith.constant 7 : index
    %c0_9 = arith.constant 0 : index
    %8 = vector.load %arg5[%c7, %c0_9] : memref<24x128xf32, #tpu.memory_space<vmem>>, vector<1x128xf32>
    %c8 = arith.constant 8 : index
    %c0_10 = arith.constant 0 : index
    %9 = vector.load %arg5[%c8, %c0_10] : memref<24x128xf32, #tpu.memory_space<vmem>>, vector<1x1xf32>
    %10 = vector.extract_strided_slice %0 {offsets = [0, 0], sizes = [8, 1], strides = [1, 1]} : vector<8x2xf32> to vector<8x1xf32>
    %11 = vector.broadcast %10 : vector<8x1xf32> to vector<8x64xf32>
    %12 = vector.broadcast %1 : vector<1x64xf32> to vector<8x64xf32>
    %13 = arith.mulf %11, %12 : vector<8x64xf32>
    %14 = vector.extract_strided_slice %0 {offsets = [0, 1], sizes = [8, 1], strides = [1, 1]} : vector<8x2xf32> to vector<8x1xf32>
    %15 = vector.broadcast %14 : vector<8x1xf32> to vector<8x64xf32>
    %16 = vector.broadcast %2 : vector<1x64xf32> to vector<8x64xf32>
    %17 = arith.mulf %15, %16 : vector<8x64xf32>
    %18 = arith.addf %13, %17 : vector<8x64xf32>
    %19 = vector.broadcast %3 : vector<1x64xf32> to vector<8x64xf32>
    %20 = arith.addf %18, %19 : vector<8x64xf32>
    %cst = arith.constant 1.000000e-01 : f32
    %21 = vector.broadcast %cst : f32 to vector<8x64xf32>
    %22 = arith.mulf %21, %20 : vector<8x64xf32>
    %23 = arith.maximumf %20, %22 : vector<8x64xf32>
    %c0_11 = arith.constant 0 : index
    %c0_12 = arith.constant 0 : index
    %24 = vector.load %arg3[%c0_11, %c0_12] : memref<192x64xf32, #tpu.memory_space<vmem>>, vector<64x64xf32>
    %cst_13 = arith.constant dense<0.000000e+00> : vector<8x64xf32>
    %25 = tpu.matmul %23, %24, %cst_13 {dimension_numbers = #tpu.dot_dimension_numbers<[1], [0], [0], [1], [0, 0, 1, 1], [], []>} : vector<8x64xf32>, vector<64x64xf32>, vector<8x64xf32> -> vector<8x64xf32>
    %26 = vector.broadcast %4 : vector<1x64xf32> to vector<8x64xf32>
    %27 = arith.addf %25, %26 : vector<8x64xf32>
    %cst_14 = arith.constant 1.000000e-01 : f32
    %28 = vector.broadcast %cst_14 : f32 to vector<8x64xf32>
    %29 = arith.mulf %28, %27 : vector<8x64xf32>
    %30 = arith.maximumf %27, %29 : vector<8x64xf32>
    %c64 = arith.constant 64 : index
    %c0_15 = arith.constant 0 : index
    %31 = vector.load %arg3[%c64, %c0_15] : memref<192x64xf32, #tpu.memory_space<vmem>>, vector<64x64xf32>
    %cst_16 = arith.constant dense<0.000000e+00> : vector<8x64xf32>
    %32 = tpu.matmul %30, %31, %cst_16 {dimension_numbers = #tpu.dot_dimension_numbers<[1], [0], [0], [1], [0, 0, 1, 1], [], []>} : vector<8x64xf32>, vector<64x64xf32>, vector<8x64xf32> -> vector<8x64xf32>
    %33 = vector.broadcast %5 : vector<1x64xf32> to vector<8x64xf32>
    %34 = arith.addf %32, %33 : vector<8x64xf32>
    %cst_17 = arith.constant 1.000000e-01 : f32
    %35 = vector.broadcast %cst_17 : f32 to vector<8x64xf32>
    %36 = arith.mulf %35, %34 : vector<8x64xf32>
    %37 = arith.maximumf %34, %36 : vector<8x64xf32>
    %c128 = arith.constant 128 : index
    %c0_18 = arith.constant 0 : index
    %38 = vector.load %arg3[%c128, %c0_18] : memref<192x64xf32, #tpu.memory_space<vmem>>, vector<64x64xf32>
    %cst_19 = arith.constant dense<0.000000e+00> : vector<8x64xf32>
    %39 = tpu.matmul %37, %38, %cst_19 {dimension_numbers = #tpu.dot_dimension_numbers<[1], [0], [0], [1], [0, 0, 1, 1], [], []>} : vector<8x64xf32>, vector<64x64xf32>, vector<8x64xf32> -> vector<8x64xf32>
    %40 = vector.broadcast %6 : vector<1x64xf32> to vector<8x64xf32>
    %41 = arith.addf %39, %40 : vector<8x64xf32>
    %cst_20 = arith.constant 1.000000e-01 : f32
    %42 = vector.broadcast %cst_20 : f32 to vector<8x64xf32>
    %43 = arith.mulf %42, %41 : vector<8x64xf32>
    %44 = arith.maximumf %41, %43 : vector<8x64xf32>
    %c0_21 = arith.constant 0 : index
    %c0_22 = arith.constant 0 : index
    %45 = vector.load %arg4[%c0_21, %c0_22] : memref<64x128xf32, #tpu.memory_space<vmem>>, vector<64x128xf32>
    %cst_23 = arith.constant dense<0.000000e+00> : vector<8x128xf32>
    %46 = tpu.matmul %44, %45, %cst_23 {dimension_numbers = #tpu.dot_dimension_numbers<[1], [0], [0], [1], [0, 0, 1, 1], [], []>} : vector<8x64xf32>, vector<64x128xf32>, vector<8x128xf32> -> vector<8x128xf32>
    %47 = vector.broadcast %7 : vector<1x128xf32> to vector<8x128xf32>
    %48 = arith.addf %46, %47 : vector<8x128xf32>
    %49 = vector.broadcast %8 : vector<1x128xf32> to vector<8x128xf32>
    %50 = arith.mulf %48, %49 : vector<8x128xf32>
    %cst_24 = arith.constant dense<0.000000e+00> : vector<8xf32>
    %51 = vector.multi_reduction <add>, %50, %cst_24 [1] : vector<8x128xf32> to vector<8xf32>
    %52 = vector.shape_cast %51 : vector<8xf32> to vector<8x1xf32>
    %53 = vector.broadcast %9 : vector<1x1xf32> to vector<8x1xf32>
    %54 = arith.addf %52, %53 : vector<8x1xf32>
    %c0_25 = arith.constant 0 : index
    %c0_26 = arith.constant 0 : index
    %55 = vector.load %arg7[%c0_25, %c0_26] : memref<8x1xf32, #tpu.memory_space<vmem>>, vector<8x1xf32>
    tpu.vector_store %arg7[%c0_25, %c0_26], %54 {strides = array<i32>} : memref<8x1xf32, #tpu.memory_space<vmem>>, vector<8x1xf32>,
    %56 = arith.mulf %48, %48 : vector<8x128xf32>
    %cst_27 = arith.constant dense<0.000000e+00> : vector<8xf32>
    %57 = vector.multi_reduction <add>, %56, %cst_27 [1] : vector<8x128xf32> to vector<8xf32>
    %58 = vector.shape_cast %57 : vector<8xf32> to vector<8x1xf32>
    %cst_28 = arith.constant 1.000000e-24 : f32
    %59 = vector.broadcast %cst_28 : f32 to vector<8x1xf32>
    %60 = arith.maximumf %58, %59 : vector<8x1xf32>
    %61 = math.rsqrt %60 : vector<8x1xf32>
    %62 = vector.broadcast %61 : vector<8x1xf32> to vector<8x128xf32>
    %63 = arith.mulf %48, %62 : vector<8x128xf32>
    %c0_29 = arith.constant 0 : index
    %c0_30 = arith.constant 0 : index
    %64 = vector.load %arg6[%c0_29, %c0_30] : memref<8x128xf32, #tpu.memory_space<vmem>>, vector<8x128xf32>
    tpu.vector_store %arg6[%c0_29, %c0_30], %63 {strides = array<i32>} : memref<8x128xf32, #tpu.memory_space<vmem>>, vector<8x128xf32>,
    %c0_31 = arith.constant 0 : index
    %c0_32 = arith.constant 0 : index
    %65 = vector.load %arg2[%c0_31, %c0_32] : memref<8x1xi32, #tpu.memory_space<vmem>>, vector<8x1xi32>
    %66 = vector.shape_cast %65 : vector<8x1xi32> to vector<8x1xi32>
    %67 = vector.broadcast %66 : vector<8x1xi32> to vector<8x64xi32>
    %c1_i32 = arith.constant 1 : i32
    %68 = vector.broadcast %c1_i32 : i32 to vector<8x64xi32>
    %69 = arith.andi %67, %68 : vector<8x64xi32>
    %c0_i32 = arith.constant 0 : i32
    %70 = vector.broadcast %c0_i32 : i32 to vector<8x64xi32>
    %71 = arith.cmpi ne, %69, %70 : vector<8x64xi32>
    %c2_i32 = arith.constant 2 : i32
    %72 = vector.broadcast %c2_i32 : i32 to vector<8x64xi32>
    %73 = arith.andi %67, %72 : vector<8x64xi32>
    %c0_i32_33 = arith.constant 0 : i32
    %74 = vector.broadcast %c0_i32_33 : i32 to vector<8x64xi32>
    %75 = arith.cmpi ne, %73, %74 : vector<8x64xi32>
    %c4_i32 = arith.constant 4 : i32
    %76 = vector.broadcast %c4_i32 : i32 to vector<8x64xi32>
    %77 = arith.andi %67, %76 : vector<8x64xi32>
    %c0_i32_34 = arith.constant 0 : i32
    %78 = vector.broadcast %c0_i32_34 : i32 to vector<8x64xi32>
    %79 = arith.cmpi ne, %77, %78 : vector<8x64xi32>
    %c10 = arith.constant 10 : index
    %c0_35 = arith.constant 0 : index
    %80 = vector.load %arg5[%c10, %c0_35] : memref<24x128xf32, #tpu.memory_space<vmem>>, vector<1x64xf32>
    %c9 = arith.constant 9 : index
    %c0_36 = arith.constant 0 : index
    %81 = vector.load %arg5[%c9, %c0_36] : memref<24x128xf32, #tpu.memory_space<vmem>>, vector<1x64xf32>
    %82 = vector.shape_cast %80 : vector<1x64xf32> to vector<1x64xf32>
    %83 = vector.broadcast %82 : vector<1x64xf32> to vector<8x64xf32>
    %84 = vector.shape_cast %81 : vector<1x64xf32> to vector<1x64xf32>
    %85 = vector.broadcast %84 : vector<1x64xf32> to vector<8x64xf32>
    %86 = arith.select %71, %83, %85 : vector<8x64xi1>, vector<8x64xf32>
    %c12 = arith.constant 12 : index
    %c0_37 = arith.constant 0 : index
    %87 = vector.load %arg5[%c12, %c0_37] : memref<24x128xf32, #tpu.memory_space<vmem>>, vector<1x64xf32>
    %c11 = arith.constant 11 : index
    %c0_38 = arith.constant 0 : index
    %88 = vector.load %arg5[%c11, %c0_38] : memref<24x128xf32, #tpu.memory_space<vmem>>, vector<1x64xf32>
    %89 = vector.shape_cast %87 : vector<1x64xf32> to vector<1x64xf32>
    %90 = vector.broadcast %89 : vector<1x64xf32> to vector<8x64xf32>
    %91 = vector.shape_cast %88 : vector<1x64xf32> to vector<1x64xf32>
    %92 = vector.broadcast %91 : vector<1x64xf32> to vector<8x64xf32>
    %93 = arith.select %71, %90, %92 : vector<8x64xi1>, vector<8x64xf32>
    %c14 = arith.constant 14 : index
    %c0_39 = arith.constant 0 : index
    %94 = vector.load %arg5[%c14, %c0_39] : memref<24x128xf32, #tpu.memory_space<vmem>>, vector<1x64xf32>
    %c13 = arith.constant 13 : index
    %c0_40 = arith.constant 0 : index
    %95 = vector.load %arg5[%c13, %c0_40] : memref<24x128xf32, #tpu.memory_space<vmem>>, vector<1x64xf32>
    %96 = vector.shape_cast %94 : vector<1x64xf32> to vector<1x64xf32>
    %97 = vector.broadcast %96 : vector<1x64xf32> to vector<8x64xf32>
    %98 = vector.shape_cast %95 : vector<1x64xf32> to vector<1x64xf32>
    %99 = vector.broadcast %98 : vector<1x64xf32> to vector<8x64xf32>
    %100 = arith.select %71, %97, %99 : vector<8x64xi1>, vector<8x64xf32>
    %c16 = arith.constant 16 : index
    %c0_41 = arith.constant 0 : index
    %101 = vector.load %arg5[%c16, %c0_41] : memref<24x128xf32, #tpu.memory_space<vmem>>, vector<1x64xf32>
    %c15 = arith.constant 15 : index
    %c0_42 = arith.constant 0 : index
    %102 = vector.load %arg5[%c15, %c0_42] : memref<24x128xf32, #tpu.memory_space<vmem>>, vector<1x64xf32>
    %103 = vector.shape_cast %101 : vector<1x64xf32> to vector<1x64xf32>
    %104 = vector.broadcast %103 : vector<1x64xf32> to vector<8x64xf32>
    %105 = vector.shape_cast %102 : vector<1x64xf32> to vector<1x64xf32>
    %106 = vector.broadcast %105 : vector<1x64xf32> to vector<8x64xf32>
    %107 = arith.select %71, %104, %106 : vector<8x64xi1>, vector<8x64xf32>
    %108 = arith.select %75, %93, %86 : vector<8x64xi1>, vector<8x64xf32>
    %109 = arith.select %75, %107, %100 : vector<8x64xi1>, vector<8x64xf32>
    %110 = arith.select %79, %109, %108 : vector<8x64xi1>, vector<8x64xf32>
    %111 = arith.mulf %44, %110 : vector<8x64xf32>
    %cst_43 = arith.constant dense<0.000000e+00> : vector<8xf32>
    %112 = vector.multi_reduction <add>, %111, %cst_43 [1] : vector<8x64xf32> to vector<8xf32>
    %113 = vector.shape_cast %112 : vector<8xf32> to vector<8x1xf32>
    %c0_44 = arith.constant 0 : index
    %c0_45 = arith.constant 0 : index
    %114 = vector.load %arg8[%c0_44, %c0_45] : memref<8x1xf32, #tpu.memory_space<vmem>>, vector<8x1xf32>
    tpu.vector_store %arg8[%c0_44, %c0_45], %113 {strides = array<i32>} : memref<8x1xf32, #tpu.memory_space<vmem>>, vector<8x1xf32>,
    return
  }
  func.func @transform_0(%arg0: i32) -> (i32, i32) {
    %c0_i32 = arith.constant 0 : i32
    %c0_i32_0 = arith.constant 0 : i32
    return %arg0, %c0_i32 : i32, i32
  }
  func.func @transform_1(%arg0: i32) -> (i32, i32) {
    %c0_i32 = arith.constant 0 : i32
    %c0_i32_0 = arith.constant 0 : i32
    return %arg0, %c0_i32 : i32, i32
  }
  func.func @transform_2(%arg0: i32) -> (i32, i32) {
    %c0_i32 = arith.constant 0 : i32
    %c0_i32_0 = arith.constant 0 : i32
    %c0_i32_1 = arith.constant 0 : i32
    return %c0_i32, %c0_i32_0 : i32, i32
  }
  func.func @transform_3(%arg0: i32) -> (i32, i32) {
    %c0_i32 = arith.constant 0 : i32
    %c0_i32_0 = arith.constant 0 : i32
    %c0_i32_1 = arith.constant 0 : i32
    return %c0_i32, %c0_i32_0 : i32, i32
  }
  func.func @transform_4(%arg0: i32) -> (i32, i32) {
    %c0_i32 = arith.constant 0 : i32
    %c0_i32_0 = arith.constant 0 : i32
    %c0_i32_1 = arith.constant 0 : i32
    return %c0_i32, %c0_i32_0 : i32, i32
  }
  func.func @transform_5(%arg0: i32) -> (i32, i32) {
    %c0_i32 = arith.constant 0 : i32
    %c0_i32_0 = arith.constant 0 : i32
    return %arg0, %c0_i32 : i32, i32
  }
  func.func @transform_6(%arg0: i32) -> (i32, i32) {
    %c0_i32 = arith.constant 0 : i32
    %c0_i32_0 = arith.constant 0 : i32
    return %arg0, %c0_i32 : i32, i32
  }
  func.func @transform_7(%arg0: i32) -> (i32, i32) {
    %c0_i32 = arith.constant 0 : i32
    %c0_i32_0 = arith.constant 0 : i32
    return %arg0, %c0_i32 : i32, i32
  }
}

</mosaic_0001>

<llo_original>
// kernel: tpu_custom_call.1
$region0: #{tpu_custom_call.1}
  #allocation0 [shape = 'u32[]', space=smem, size = 0x4, offset = 0x4, fixed_abs, tag = 'smem constant byte address 0x4 - core index']
  #allocation1 [shape = 'u32[144,128]{1,0:T(1,128)}', space=vmem, size = 0x12000, scoped, tag = 'internal scratch']
  %s0 = inlined_call_operand.vmem [shape: f32[8,2], index: 0, kind: input, shape index: {}]
  %s1 = inlined_call_operand.vmem [shape: s32[8,1], index: 1, kind: input, shape index: {}]
  %s2 = inlined_call_operand.vmem [shape: f32[192,64], index: 2, kind: input, shape index: {}]
  %s3 = inlined_call_operand.vmem [shape: f32[64,128], index: 3, kind: input, shape index: {}]
  %s4 = inlined_call_operand.vmem [shape: f32[24,128], index: 4, kind: input, shape index: {}]
  %s5 = inlined_call_operand.hbm [shape: f32[8,128], index: 5, kind: output, shape index: {0}]
  %s6 = inlined_call_operand.vmem [shape: f32[8,1], index: 6, kind: output, shape index: {1}]
  %s7 = inlined_call_operand.vmem [shape: f32[8,1], index: 7, kind: output, shape index: {2}]
  %8 = xla_tuple %s5, %s6, %s7
  %s9 = sld [smem:[#allocation0]]
  $region46: #{tpu_custom_call.1} parent=0
    _
  %s11 = ssub.s32 1, %s9
  %s12 = scalar_select 0, %s11, %s9
  $region1: #{tpu_custom_call.1} parent=0
    #allocation2 [shape = 'u8[4096]{0}', space=vmem, size = 0x1000, scoped, tag = 'output window, operand 0, single buffered']
    #allocation3 [shape = 's32[1]{0}', space=sflag, size = 0x4, scoped, tag = 'scoped memory for tpu_custom_call.1']
    %13 = vsyncpa [#allocation3], 0
    // Predicated region
    $region2: #{tpu_custom_call.1} parent=1 // pred_check
      _
    $region3: #{tpu_custom_call.1} parent=1 // pred_check_branch
      %15 = sbr.rel (0) target = $region5
    $region4: #{tpu_custom_call.1} parent=1 // pred_region
      _
    $region5: #{tpu_custom_call.1} parent=1 // pred_fallthru
      _
    // Predicated region
    $region6: #{tpu_custom_call.1} parent=1 // pred_check
      _
    $region7: #{tpu_custom_call.1} parent=1 // pred_check_branch
      %17 = sbr.rel (0) target = $region9
    $region8: #{tpu_custom_call.1} parent=1 // pred_region
      _
    $region9: #{tpu_custom_call.1} parent=1 // pred_fallthru
      _
    // Predicated region
    $region10: #{tpu_custom_call.1} parent=1 // pred_check
      _
    $region11: #{tpu_custom_call.1} parent=1 // pred_check_branch
      %19 = sbr.rel (0) target = $region13
    $region12: #{tpu_custom_call.1} parent=1 // pred_region
      _
    $region13: #{tpu_custom_call.1} parent=1 // pred_fallthru
      _
    // Predicated region
    $region14: #{tpu_custom_call.1} parent=1 // pred_check
      _
    $region15: #{tpu_custom_call.1} parent=1 // pred_check_branch
      %21 = sbr.rel (0) target = $region17
    $region16: #{tpu_custom_call.1} parent=1 // pred_region
      _
    $region17: #{tpu_custom_call.1} parent=1 // pred_fallthru
      _
    // Predicated region
    $region18: #{tpu_custom_call.1} parent=1 // pred_check
      _
    $region19: #{tpu_custom_call.1} parent=1 // pred_check_branch
      %23 = sbr.rel (0) target = $region21
    $region20: #{tpu_custom_call.1} parent=1 // pred_region
      _
    $region21: #{tpu_custom_call.1} parent=1 // pred_fallthru
      _
    %v24 = vld [vmem:[%s0] sm:$0xff]
    %v25 = vld [vmem:[%s4] sm:$0x1]
    %v26 = vld [vmem:[%s4 + $0x1] sm:$0x1]
    %v27 = vld [vmem:[%s4 + $0x2] sm:$0x1]
    %v28 = vld [vmem:[%s4 + $0x3] sm:$0x1]
    %v29 = vld [vmem:[%s4 + $0x4] sm:$0x1]
    %v30 = vld [vmem:[%s4 + $0x5] sm:$0x1]
    %v31 = vld [vmem:[%s4 + $0x6] sm:$0x1]
    %v32 = vld [vmem:[%s4 + $0x7] sm:$0x1]
    %v33 = vld [vmem:[%s4 + $0x8] sm:$0x1]
    %35 = vset.pattern.permute.xlu0 0
    %36 = vperm.xlu0 %35, %v24
    %v37 = vpop.permute.xlu0 %36
    %v39 = vlaneseq
    %v40 = vshrl.u32 %v39, 7
    %v41 = vsub.s32 0, %v40
    %v42 = vrot.slane %v25, %v41
    %v43 = vmul.f32 %v37, %v42
    %44 = vset.pattern.permute.xlu0 1
    %45 = vperm.xlu0 %44, %v24
    %v46 = vpop.permute.xlu0 %45
    %v48 = vlaneseq
    %v49 = vshrl.u32 %v48, 7
    %v50 = vsub.s32 0, %v49
    %v51 = vrot.slane %v26, %v50
    %v52 = vmul.f32 %v46, %v51
    %v53 = vadd.f32 %v43, %v52
    %v54 = vlaneseq
    %v55 = vshrl.u32 %v54, 7
    %v56 = vsub.s32 0, %v55
    %v57 = vrot.slane %v27, %v56
    %v58 = vadd.f32 %v53, %v57
    %v59 = vmul.f32 %v58, 0.1
    %v60 = vmax.f32 %v58, %v59
    %v61 = vld [vmem:[%s2] sm:$0xff]
    %v62 = vld [vmem:[%s2 + $0x8] sm:$0xff]
    %v63 = vld [vmem:[%s2 + $0x10] sm:$0xff]
    %v64 = vld [vmem:[%s2 + $0x18] sm:$0xff]
    %v65 = vld [vmem:[%s2 + $0x20] sm:$0xff]
    %v66 = vld [vmem:[%s2 + $0x28] sm:$0xff]
    %v67 = vld [vmem:[%s2 + $0x30] sm:$0xff]
    %v68 = vld [vmem:[%s2 + $0x38] sm:$0xff]
    %v69 = vlaneseq
    %v70 = vshrl.u32 %v69, 7
    %v71 = vsub.s32 0, %v70
    %v72 = vrot.slane %v28, %v71
    %vm73 = vcmask 523264
    %v75 = vsel %vm73, %v60, 0
    %77 = vmatprep.subr.mxu0 0.0
    %78 = vmatpush1.msra.mxu0 %v61
    %79 = vmatprep.subr.mxu0 0.0
    %80 = vmatpush1.msra.mxu0 %v62
    %81 = vmatprep.subr.mxu0 0.0
    %82 = vmatpush1.msra.mxu0 %v63
    %83 = vmatprep.subr.mxu0 0.0
    %84 = vmatpush1.msra.mxu0 %v64
    %85 = vmatprep.subr.mxu0 0.0
    %86 = vmatpush1.msra.mxu0 %v65
    %87 = vmatprep.subr.mxu0 0.0
    %88 = vmatpush1.msra.mxu0 %v66
    %89 = vmatprep.subr.mxu0 0.0
    %90 = vmatpush1.msra.mxu0 %v67
    %91 = vmatprep.subr.mxu0 0.0
    %92 = vmatpush1.msra.mxu0 %v68
    %93 = vmatprep.subr.mxu0 0.0
    %94 = vmatpush1.msra.mxu0 0.0
    %95 = vmatprep.subr.mxu0 0.0
    %96 = vmatpush1.msra.mxu0 0.0
    %97 = vmatprep.subr.mxu0 0.0
    %98 = vmatpush1.msra.mxu0 0.0
    %99 = vmatprep.subr.mxu0 0.0
    %100 = vmatpush1.msra.mxu0 0.0
    %101 = vmatprep.subr.mxu0 0.0
    %102 = vmatpush1.msra.mxu0 0.0
    %103 = vmatprep.subr.mxu0 0.0
    %104 = vmatpush1.msra.mxu0 0.0
    %105 = vmatprep.subr.mxu0 0.0
    %106 = vmatpush1.msra.mxu0 0.0
    %107 = vmatprep.subr.mxu0 0.0
    %108 = vmatpush1.msra.mxu0 0.0
    %109 = vmatprep.subr.mxu0 0.0
    %110 = vmatpush1.msra.mxu0 0.0
    %111 = vmatprep.subr.mxu0 0.0
    %112 = vmatpush1.msra.mxu0 0.0
    %113 = vmatprep.subr.mxu0 0.0
    %114 = vmatpush1.msra.mxu0 0.0
    %115 = vmatprep.subr.mxu0 0.0
    %116 = vmatpush1.msra.mxu0 0.0
    %117 = vmatprep.subr.mxu0 0.0
    %118 = vmatpush1.msra.mxu0 0.0
    %119 = vmatprep.subr.mxu0 0.0
    %120 = vmatpush1.msra.mxu0 0.0
    %121 = vmatprep.subr.mxu0 0.0
    %122 = vmatpush1.msra.mxu0 0.0
    %123 = vmatprep.subr.mxu0 0.0
    %124 = vmatpush1.msra.mxu0 0.0
    %125 = vmatprep.subr.mxu0 0.0
    %126 = vmatpush1.msra.mxu0 0.0
    %127 = vmatprep.subr.mxu0 0.0
    %128 = vmatpush1.msra.mxu0 0.0
    %129 = vmatprep.subr.mxu0 0.0
    %130 = vmatpush1.msra.mxu0 0.0
    %131 = vmatprep.subr.mxu0 0.0
    %132 = vmatpush1.msra.mxu0 0.0
    %133 = vmatprep.subr.mxu0 0.0
    %134 = vmatpush1.msra.mxu0 0.0
    %135 = vmatprep.subr.mxu0 0.0
    %136 = vmatpush1.msra.mxu0 0.0
    %137 = vmatprep.subr.mxu0 0.0
    %138 = vmatpush1.msra.mxu0 0.0
    %139 = vmatprep.subr.mxu0 0.0
    %140 = vmatpush1.msra.mxu0 0.0
    %141 = vmatprep.mubr.f32.mxu0 0.0
    %142 = vmatmul.mubr.f32.gmra.mrb[0].mxu0 %v75
    %v143 = vpop.f32.mrb[0].mxu0
    %v144 = vadd.f32 %v72, %v143
    %v145 = vpop.f32.mrb[0].mxu0
    %146 = vdwg.mxu0
    %v147 = vmul.f32 %v144, 0.1
    %v148 = vmax.f32 %v144, %v147
    %v149 = vld [vmem:[%s2 + $0x40] sm:$0xff]
    %v150 = vld [vmem:[%s2 + $0x48] sm:$0xff]
    %v151 = vld [vmem:[%s2 + $0x50] sm:$0xff]
    %v152 = vld [vmem:[%s2 + $0x58] sm:$0xff]
    %v153 = vld [vmem:[%s2 + $0x60] sm:$0xff]
    %v154 = vld [vmem:[%s2 + $0x68] sm:$0xff]
    %v155 = vld [vmem:[%s2 + $0x70] sm:$0xff]
    %v156 = vld [vmem:[%s2 + $0x78] sm:$0xff]
    %v157 = vlaneseq
    %v158 = vshrl.u32 %v157, 7
    %v159 = vsub.s32 0, %v158
    %v160 = vrot.slane %v29, %v159
    %v162 = vsel %vm73, %v148, 0
    %164 = vmatprep.subr.mxu0 0.0
    %165 = vmatpush1.msra.mxu0 %v149
    %166 = vmatprep.subr.mxu0 0.0
    %167 = vmatpush1.msra.mxu0 %v150
    %168 = vmatprep.subr.mxu0 0.0
    %169 = vmatpush1.msra.mxu0 %v151
    %170 = vmatprep.subr.mxu0 0.0
    %171 = vmatpush1.msra.mxu0 %v152
    %172 = vmatprep.subr.mxu0 0.0
    %173 = vmatpush1.msra.mxu0 %v153
    %174 = vmatprep.subr.mxu0 0.0
    %175 = vmatpush1.msra.mxu0 %v154
    %176 = vmatprep.subr.mxu0 0.0
    %177 = vmatpush1.msra.mxu0 %v155
    %178 = vmatprep.subr.mxu0 0.0
    %179 = vmatpush1.msra.mxu0 %v156
    %180 = vmatprep.subr.mxu0 0.0
    %181 = vmatpush1.msra.mxu0 0.0
    %182 = vmatprep.subr.mxu0 0.0
    %183 = vmatpush1.msra.mxu0 0.0
    %184 = vmatprep.subr.mxu0 0.0
    %185 = vmatpush1.msra.mxu0 0.0
    %186 = vmatprep.subr.mxu0 0.0
    %187 = vmatpush1.msra.mxu0 0.0
    %188 = vmatprep.subr.mxu0 0.0
    %189 = vmatpush1.msra.mxu0 0.0
    %190 = vmatprep.subr.mxu0 0.0
    %191 = vmatpush1.msra.mxu0 0.0
    %192 = vmatprep.subr.mxu0 0.0
    %193 = vmatpush1.msra.mxu0 0.0
    %194 = vmatprep.subr.mxu0 0.0
    %195 = vmatpush1.msra.mxu0 0.0
    %196 = vmatprep.subr.mxu0 0.0
    %197 = vmatpush1.msra.mxu0 0.0
    %198 = vmatprep.subr.mxu0 0.0
    %199 = vmatpush1.msra.mxu0 0.0
    %200 = vmatprep.subr.mxu0 0.0
    %201 = vmatpush1.msra.mxu0 0.0
    %202 = vmatprep.subr.mxu0 0.0
    %203 = vmatpush1.msra.mxu0 0.0
    %204 = vmatprep.subr.mxu0 0.0
    %205 = vmatpush1.msra.mxu0 0.0
    %206 = vmatprep.subr.mxu0 0.0
    %207 = vmatpush1.msra.mxu0 0.0
    %208 = vmatprep.subr.mxu0 0.0
    %209 = vmatpush1.msra.mxu0 0.0
    %210 = vmatprep.subr.mxu0 0.0
    %211 = vmatpush1.msra.mxu0 0.0
    %212 = vmatprep.subr.mxu0 0.0
    %213 = vmatpush1.msra.mxu0 0.0
    %214 = vmatprep.subr.mxu0 0.0
    %215 = vmatpush1.msra.mxu0 0.0
    %216 = vmatprep.subr.mxu0 0.0
    %217 = vmatpush1.msra.mxu0 0.0
    %218 = vmatprep.subr.mxu0 0.0
    %219 = vmatpush1.msra.mxu0 0.0
    %220 = vmatprep.subr.mxu0 0.0
    %221 = vmatpush1.msra.mxu0 0.0
    %222 = vmatprep.subr.mxu0 0.0
    %223 = vmatpush1.msra.mxu0 0.0
    %224 = vmatprep.subr.mxu0 0.0
    %225 = vmatpush1.msra.mxu0 0.0
    %226 = vmatprep.subr.mxu0 0.0
    %227 = vmatpush1.msra.mxu0 0.0
    %228 = vmatprep.mubr.f32.mxu0 0.0
    %229 = vmatmul.mubr.f32.gmra.mrb[0].mxu0 %v162
    %v230 = vpop.f32.mrb[0].mxu0
    %v231 = vadd.f32 %v160, %v230
    %v232 = vpop.f32.mrb[0].mxu0
    %233 = vdwg.mxu0
    %v234 = vmul.f32 %v231, 0.1
    %v235 = vmax.f32 %v231, %v234
    %v236 = vld [vmem:[%s2 + $0x80] sm:$0xff]
    %v237 = vld [vmem:[%s2 + $0x88] sm:$0xff]
    %v238 = vld [vmem:[%s2 + $0x90] sm:$0xff]
    %v239 = vld [vmem:[%s2 + $0x98] sm:$0xff]
    %v240 = vld [vmem:[%s2 + $0xa0] sm:$0xff]
    %v241 = vld [vmem:[%s2 + $0xa8] sm:$0xff]
    %v242 = vld [vmem:[%s2 + $0xb0] sm:$0xff]
    %v243 = vld [vmem:[%s2 + $0xb8] sm:$0xff]
    %v244 = vlaneseq
    %v245 = vshrl.u32 %v244, 7
    %v246 = vsub.s32 0, %v245
    %v247 = vrot.slane %v30, %v246
    %v249 = vsel %vm73, %v235, 0
    %251 = vmatprep.subr.mxu0 0.0
    %252 = vmatpush1.msra.mxu0 %v236
    %253 = vmatprep.subr.mxu0 0.0
    %254 = vmatpush1.msra.mxu0 %v237
    %255 = vmatprep.subr.mxu0 0.0
    %256 = vmatpush1.msra.mxu0 %v238
    %257 = vmatprep.subr.mxu0 0.0
    %258 = vmatpush1.msra.mxu0 %v239
    %259 = vmatprep.subr.mxu0 0.0
    %260 = vmatpush1.msra.mxu0 %v240
    %261 = vmatprep.subr.mxu0 0.0
    %262 = vmatpush1.msra.mxu0 %v241
    %263 = vmatprep.subr.mxu0 0.0
    %264 = vmatpush1.msra.mxu0 %v242
    %265 = vmatprep.subr.mxu0 0.0
    %266 = vmatpush1.msra.mxu0 %v243
    %267 = vmatprep.subr.mxu0 0.0
    %268 = vmatpush1.msra.mxu0 0.0
    %269 = vmatprep.subr.mxu0 0.0
    %270 = vmatpush1.msra.mxu0 0.0
    %271 = vmatprep.subr.mxu0 0.0
    %272 = vmatpush1.msra.mxu0 0.0
    %273 = vmatprep.subr.mxu0 0.0
    %274 = vmatpush1.msra.mxu0 0.0
    %275 = vmatprep.subr.mxu0 0.0
    %276 = vmatpush1.msra.mxu0 0.0
    %277 = vmatprep.subr.mxu0 0.0
    %278 = vmatpush1.msra.mxu0 0.0
    %279 = vmatprep.subr.mxu0 0.0
    %280 = vmatpush1.msra.mxu0 0.0
    %281 = vmatprep.subr.mxu0 0.0
    %282 = vmatpush1.msra.mxu0 0.0
    %283 = vmatprep.subr.mxu0 0.0
    %284 = vmatpush1.msra.mxu0 0.0
    %285 = vmatprep.subr.mxu0 0.0
    %286 = vmatpush1.msra.mxu0 0.0
    %287 = vmatprep.subr.mxu0 0.0
    %288 = vmatpush1.msra.mxu0 0.0
    %289 = vmatprep.subr.mxu0 0.0
    %290 = vmatpush1.msra.mxu0 0.0
    %291 = vmatprep.subr.mxu0 0.0
    %292 = vmatpush1.msra.mxu0 0.0
    %293 = vmatprep.subr.mxu0 0.0
    %294 = vmatpush1.msra.mxu0 0.0
    %295 = vmatprep.subr.mxu0 0.0
    %296 = vmatpush1.msra.mxu0 0.0
    %297 = vmatprep.subr.mxu0 0.0
    %298 = vmatpush1.msra.mxu0 0.0
    %299 = vmatprep.subr.mxu0 0.0
    %300 = vmatpush1.msra.mxu0 0.0
    %301 = vmatprep.subr.mxu0 0.0
    %302 = vmatpush1.msra.mxu0 0.0
    %303 = vmatprep.subr.mxu0 0.0
    %304 = vmatpush1.msra.mxu0 0.0
    %305 = vmatprep.subr.mxu0 0.0
    %306 = vmatpush1.msra.mxu0 0.0
    %307 = vmatprep.subr.mxu0 0.0
    %308 = vmatpush1.msra.mxu0 0.0
    %309 = vmatprep.subr.mxu0 0.0
    %310 = vmatpush1.msra.mxu0 0.0
    %311 = vmatprep.subr.mxu0 0.0
    %312 = vmatpush1.msra.mxu0 0.0
    %313 = vmatprep.subr.mxu0 0.0
    %314 = vmatpush1.msra.mxu0 0.0
    %315 = vmatprep.mubr.f32.mxu0 0.0
    %316 = vmatmul.mubr.f32.gmra.mrb[0].mxu0 %v249
    %v317 = vpop.f32.mrb[0].mxu0
    %v318 = vadd.f32 %v247, %v317
    %v319 = vpop.f32.mrb[0].mxu0
    %320 = vdwg.mxu0
    %v321 = vmul.f32 %v318, 0.1
    %v322 = vmax.f32 %v318, %v321
    %v323 = vld [vmem:[%s3] sm:$0xff]
    %v324 = vld [vmem:[%s3 + $0x8] sm:$0xff]
    %v325 = vld [vmem:[%s3 + $0x10] sm:$0xff]
    %v326 = vld [vmem:[%s3 + $0x18] sm:$0xff]
    %v327 = vld [vmem:[%s3 + $0x20] sm:$0xff]
    %v328 = vld [vmem:[%s3 + $0x28] sm:$0xff]
    %v329 = vld [vmem:[%s3 + $0x30] sm:$0xff]
    %v330 = vld [vmem:[%s3 + $0x38] sm:$0xff]
    %v331 = vlaneseq
    %v332 = vshrl.u32 %v331, 7
    %v333 = vsub.s32 0, %v332
    %v334 = vrot.slane %v31, %v333
    %v336 = vsel %vm73, %v322, 0
    %338 = vmatprep.subr.mxu0 0.0
    %339 = vmatpush1.msra.mxu0 %v323
    %340 = vmatprep.subr.mxu0 0.0
    %341 = vmatpush1.msra.mxu0 %v324
    %342 = vmatprep.subr.mxu0 0.0
    %343 = vmatpush1.msra.mxu0 %v325
    %344 = vmatprep.subr.mxu0 0.0
    %345 = vmatpush1.msra.mxu0 %v326
    %346 = vmatprep.subr.mxu0 0.0
    %347 = vmatpush1.msra.mxu0 %v327
    %348 = vmatprep.subr.mxu0 0.0
    %349 = vmatpush1.msra.mxu0 %v328
    %350 = vmatprep.subr.mxu0 0.0
    %351 = vmatpush1.msra.mxu0 %v329
    %352 = vmatprep.subr.mxu0 0.0
    %353 = vmatpush1.msra.mxu0 %v330
    %354 = vmatprep.subr.mxu0 0.0
    %355 = vmatpush1.msra.mxu0 0.0
    %356 = vmatprep.subr.mxu0 0.0
    %357 = vmatpush1.msra.mxu0 0.0
    %358 = vmatprep.subr.mxu0 0.0
    %359 = vmatpush1.msra.mxu0 0.0
    %360 = vmatprep.subr.mxu0 0.0
    %361 = vmatpush1.msra.mxu0 0.0
    %362 = vmatprep.subr.mxu0 0.0
    %363 = vmatpush1.msra.mxu0 0.0
    %364 = vmatprep.subr.mxu0 0.0
    %365 = vmatpush1.msra.mxu0 0.0
    %366 = vmatprep.subr.mxu0 0.0
    %367 = vmatpush1.msra.mxu0 0.0
    %368 = vmatprep.subr.mxu0 0.0
    %369 = vmatpush1.msra.mxu0 0.0
    %370 = vmatprep.subr.mxu0 0.0
    %371 = vmatpush1.msra.mxu0 0.0
    %372 = vmatprep.subr.mxu0 0.0
    %373 = vmatpush1.msra.mxu0 0.0
    %374 = vmatprep.subr.mxu0 0.0
    %375 = vmatpush1.msra.mxu0 0.0
    %376 = vmatprep.subr.mxu0 0.0
    %377 = vmatpush1.msra.mxu0 0.0
    %378 = vmatprep.subr.mxu0 0.0
    %379 = vmatpush1.msra.mxu0 0.0
    %380 = vmatprep.subr.mxu0 0.0
    %381 = vmatpush1.msra.mxu0 0.0
    %382 = vmatprep.subr.mxu0 0.0
    %383 = vmatpush1.msra.mxu0 0.0
    %384 = vmatprep.subr.mxu0 0.0
    %385 = vmatpush1.msra.mxu0 0.0
    %386 = vmatprep.subr.mxu0 0.0
    %387 = vmatpush1.msra.mxu0 0.0
    %388 = vmatprep.subr.mxu0 0.0
    %389 = vmatpush1.msra.mxu0 0.0
    %390 = vmatprep.subr.mxu0 0.0
    %391 = vmatpush1.msra.mxu0 0.0
    %392 = vmatprep.subr.mxu0 0.0
    %393 = vmatpush1.msra.mxu0 0.0
    %394 = vmatprep.subr.mxu0 0.0
    %395 = vmatpush1.msra.mxu0 0.0
    %396 = vmatprep.subr.mxu0 0.0
    %397 = vmatpush1.msra.mxu0 0.0
    %398 = vmatprep.subr.mxu0 0.0
    %399 = vmatpush1.msra.mxu0 0.0
    %400 = vmatprep.subr.mxu0 0.0
    %401 = vmatpush1.msra.mxu0 0.0
    %402 = vmatprep.mubr.f32.mxu0 0.0
    %403 = vmatmul.mubr.f32.gmra.mrb[0].mxu0 %v336
    %v404 = vpop.f32.mrb[0].mxu0
    %v405 = vadd.f32 %v334, %v404
    %v406 = vpop.f32.mrb[0].mxu0
    %407 = vdwg.mxu0
    %v408 = vlaneseq
    %v409 = vshrl.u32 %v408, 7
    %v410 = vsub.s32 0, %v409
    %v411 = vrot.slane %v32, %v410
    %v412 = vmul.f32 %v405, %v411
    %413 = vadd.xlane.f32.xlu0 %v412
    %v414 = vpop.xlane.xlu0 %413
    %v415 = vlaneseq
    %v416 = vshrl.u32 %v415, 7
    %v417 = vsub.s32 0, %v416
    %v418 = vrot.slane %v33, %v417
    %v419 = vadd.f32 %v414, %v418
    %vm420 = vcmask 7168
    %421 = vst.msk [vmem:[%s6] sm:$0xff] %vm420, %v419
    %v422 = vmul.f32 %v405, %v405
    %423 = vadd.xlane.f32.xlu0 %v422
    %v424 = vpop.xlane.xlu0 %423
    %v425 = vmax.f32 %v424, 1e-24
    %v426 = vrsqrt.pop %v425
    %v427 = vmul.f32 %v405, %v426
    %428 = vst [vmem:[#allocation2] sm:$0xff] %v427
    %v429 = vld [vmem:[%s1] sm:$0xff]
    %430 = vset.pattern.permute.xlu0 0
    %431 = vperm.xlu0 %430, %v429
    %v432 = vpop.permute.xlu0 %431
    %v433 = vand.u32 %v432, 1
    %vm434 = vcmp.ne.s32.totalorder %v433, 0
    %v435 = vand.u32 %v432, 2
    %vm436 = vcmp.ne.s32.totalorder %v435, 0
    %v437 = vand.u32 %v432, 4
    %vm438 = vcmp.ne.s32.totalorder %v437, 0
    %v439 = vld [vmem:[%s4 + $0xa] sm:$0x1]
    %v440 = vld [vmem:[%s4 + $0x9] sm:$0x1]
    %v441 = vlaneseq
    %v442 = vshrl.u32 %v441, 7
    %v443 = vsub.s32 0, %v442
    %v444 = vrot.slane %v439, %v443
    %v445 = vlaneseq
    %v446 = vshrl.u32 %v445, 7
    %v447 = vsub.s32 0, %v446
    %v448 = vrot.slane %v440, %v447
    %v449 = vsel %vm434, %v444, %v448
    %v450 = vld [vmem:[%s4 + $0xc] sm:$0x1]
    %v451 = vld [vmem:[%s4 + $0xb] sm:$0x1]
    %v452 = vlaneseq
    %v453 = vshrl.u32 %v452, 7
    %v454 = vsub.s32 0, %v453
    %v455 = vrot.slane %v450, %v454
    %v456 = vlaneseq
    %v457 = vshrl.u32 %v456, 7
    %v458 = vsub.s32 0, %v457
    %v459 = vrot.slane %v451, %v458
    %v460 = vsel %vm434, %v455, %v459
    %v461 = vld [vmem:[%s4 + $0xe] sm:$0x1]
    %v462 = vld [vmem:[%s4 + $0xd] sm:$0x1]
    %v463 = vlaneseq
    %v464 = vshrl.u32 %v463, 7
    %v465 = vsub.s32 0, %v464
    %v466 = vrot.slane %v461, %v465
    %v467 = vlaneseq
    %v468 = vshrl.u32 %v467, 7
    %v469 = vsub.s32 0, %v468
    %v470 = vrot.slane %v462, %v469
    %v471 = vsel %vm434, %v466, %v470
    %v472 = vld [vmem:[%s4 + $0x10] sm:$0x1]
    %v473 = vld [vmem:[%s4 + $0xf] sm:$0x1]
    %v474 = vlaneseq
    %v475 = vshrl.u32 %v474, 7
    %v476 = vsub.s32 0, %v475
    %v477 = vrot.slane %v472, %v476
    %v478 = vlaneseq
    %v479 = vshrl.u32 %v478, 7
    %v480 = vsub.s32 0, %v479
    %v481 = vrot.slane %v473, %v480
    %v482 = vsel %vm434, %v477, %v481
    %v483 = vsel %vm436, %v460, %v449
    %v484 = vsel %vm436, %v482, %v471
    %v485 = vsel %vm438, %v484, %v483
    %v486 = vmul.f32 %v322, %v485
    %v487 = vsel %vm73, %v486, 0.0
    %488 = vadd.xlane.f32.xlu0 %v487
    %v489 = vpop.xlane.xlu0 %488
    %490 = vst.msk [vmem:[%s7] sm:$0xff] %vm420, %v489
    // Predicated region
    $region22: #{tpu_custom_call.1} parent=1 // pred_check
      _
    $region23: #{tpu_custom_call.1} parent=1 // pred_check_branch
      %492 = sbr.rel (0) target = $region25
    $region24: #{tpu_custom_call.1} parent=1 // pred_region
      %s494 = ssub.s32 128, 128
      %495 = vsyncadd [#allocation3], %s494
      %s497 = sshll.u32 [#allocation2], 4
      %s498 = int_to_ptr.vmem [resolvable:$true] %s497
      %500 = dma.vmem_to_hbm [thread:$0]  %s498, 128, %s5, [#allocation3]
    $region25: #{tpu_custom_call.1} parent=1 // pred_fallthru
      _
    // Predicated region
    $region26: #{tpu_custom_call.1} parent=1 // pred_check
      _
    $region27: #{tpu_custom_call.1} parent=1 // pred_check_branch
      %502 = sbr.rel (0) target = $region29
    $region28: #{tpu_custom_call.1} parent=1 // pred_region
      _
    $region29: #{tpu_custom_call.1} parent=1 // pred_fallthru
      _
    // Predicated region
    $region30: #{tpu_custom_call.1} parent=1 // pred_check
      _
    $region31: #{tpu_custom_call.1} parent=1 // pred_check_branch
      %504 = sbr.rel (0) target = $region33
    $region32: #{tpu_custom_call.1} parent=1 // pred_region
      _
    $region33: #{tpu_custom_call.1} parent=1 // pred_fallthru
      _
    // Predicated region
    $region34: #{tpu_custom_call.1} parent=1 // pred_check
      _
    $region35: #{tpu_custom_call.1} parent=1 // pred_check_branch
      %506 = sbr.rel (0) target = $region37
    $region36: #{tpu_custom_call.1} parent=1 // pred_region
      %507 = dma.done [#allocation3], 128
    $region37: #{tpu_custom_call.1} parent=1 // pred_fallthru
      _
    // Predicated region
    $region38: #{tpu_custom_call.1} parent=1 // pred_check
      _
    $region39: #{tpu_custom_call.1} parent=1 // pred_check_branch
      %509 = sbr.rel (0) target = $region41
    $region40: #{tpu_custom_call.1} parent=1 // pred_region
      _
    $region41: #{tpu_custom_call.1} parent=1 // pred_fallthru
      _
    // Predicated region
    $region42: #{tpu_custom_call.1} parent=1 // pred_check
      _
    $region43: #{tpu_custom_call.1} parent=1 // pred_check_branch
      %511 = sbr.rel (0) target = $region45
    $region44: #{tpu_custom_call.1} parent=1 // pred_region
      _
    $region45: #{tpu_custom_call.1} parent=1 // pred_fallthru
      _
    %512 = vsyncpa [#allocation3], 1

</llo_original>
